<compile_context>
chip_gen: v6e
topology: v6e:2x2x1
jax: 0.10.0
libtpu: 0.0.40
codegen_flags: <defaults>
</compile_context>

<pallas_src>
import jax
import jax.numpy as jnp
from jax.experimental import pallas as pl
from jax.experimental.pallas import tpu as pltpu


def mlp_kernel(x_ref, w1_ref, b1_ref, w2_ref, b2_ref, o_ref):
    # x:  (TB, D) tile       w1: (D, H) resident     b1: (1, H) resident
    # w2: (1, H)  resident   b2: (1, 1) in SMEM      o:  (TB, 1) tile
    x = x_ref[...].astype(jnp.float32)                     # x.float()
    # fc1 on the MXU, f32 accumulation, bias broadcast on the VPU.
    h = jnp.dot(x, w1_ref[...], preferred_element_type=jnp.float32) + b1_ref[...]
    h = jnp.maximum(h, 0.0)                                 # relu
    # fc2: N=1 -> VPU multiply + XLU lane reduction instead of an MXU pass.
    y = jnp.sum(h * w2_ref[...], axis=-1, keepdims=True) + b2_ref[0, 0]
    o_ref[...] = y


def prepare_params(w1, b1, w2, b2):
    """One-time conversion from PyTorch nn.Linear layout to kernel layout.

    w1: (H, D), b1: (H,), w2: (1, H), b2: (1,)  ->  (D, H), (1, H), (1, H), (1, 1)
    Done once at parameter-load time so the per-call path emits no transposes.
    """
    w1_t = jnp.asarray(w1, jnp.float32).T                   # (D, H)
    b1_r = jnp.asarray(b1, jnp.float32).reshape(1, -1)      # (1, H)
    w2_r = jnp.asarray(w2, jnp.float32).reshape(1, -1)      # (1, H)
    b2_r = jnp.asarray(b2, jnp.float32).reshape(1, 1)       # (1, 1) -> SMEM
    return w1_t, b1_r, w2_r, b2_r


def matrix_to_float_nn(x, w1_t, b1_r, w2_r, b2_r, block_b=512):
    """x: (B, D) any float dtype; params in kernel layout from prepare_params."""
    B, D = x.shape
    H = w1_t.shape[1]
    tb = min(block_b, B)                # block rows: tb % 8 == 0 or tb == B
    grid = (pl.cdiv(B, tb),)

    return pl.pallas_call(
        mlp_kernel,
        out_shape=jax.ShapeDtypeStruct((B, 1), jnp.float32),
        grid=grid,
        in_specs=[
            pl.BlockSpec((tb, D), lambda i: (i, 0)),     # x tile: pipelined
            pl.BlockSpec((D, H), lambda i: (0, 0)),      # w1: resident in VMEM
            pl.BlockSpec((1, H), lambda i: (0, 0)),      # b1: resident in VMEM
            pl.BlockSpec((1, H), lambda i: (0, 0)),      # w2 row: resident
            pl.BlockSpec(memory_space=pltpu.MemorySpace.SMEM),  # b2 scalar
        ],
        out_specs=pl.BlockSpec((tb, 1), lambda i: (i, 0)),
        compiler_params=pltpu.CompilerParams(
            dimension_semantics=("parallel",),           # shard tiles across TCs
            vmem_limit_bytes=32 * 1024 * 1024,           # explicit, v7x-safe
        ),
    )(x, w1_t, b1_r, w2_r, b2_r)


if __name__ == "__main__":
    key = jax.random.PRNGKey(0)
    B = 256               # small batch: 2 grid steps at block_b=128
    INPUT_SIZE = 32       # inputSize
    HIDDEN = INPUT_SIZE // 2

    k_x, k_w1, k_b1, k_w2, k_b2 = jax.random.split(key, 5)

    # Deterministic synthetic parameters (PyTorch nn.Linear shapes).
    x = jax.random.normal(k_x, (B, INPUT_SIZE), dtype=jnp.float32)
    w1 = jax.random.normal(k_w1, (HIDDEN, INPUT_SIZE), dtype=jnp.float32) * 0.1
    b1 = jax.random.normal(k_b1, (HIDDEN,), dtype=jnp.float32) * 0.1
    w2 = jax.random.normal(k_w2, (1, HIDDEN), dtype=jnp.float32) * 0.1
    b2 = jax.random.normal(k_b2, (1,), dtype=jnp.float32) * 0.1

    # One-time layout prep (hoisted out of the per-call path).
    params = prepare_params(w1, b1, w2, b2)

    fwd = jax.jit(matrix_to_float_nn, static_argnames=("block_b",))
    out = fwd(x, *params, block_b=128)   # 2-step grid: exercises pipelining / 2 TCs
    jax.block_until_ready(out)

    # Pure-JAX reference check (same math, outside Pallas).
    ref = jnp.maximum(x @ w1.T + b1, 0.0) @ w2.T + b2
    assert out.shape == (B, 1)
    assert jnp.allclose(out, ref, atol=2e-5, rtol=1e-5)

    print("KERNEL_OK")
</pallas_src>

<mosaic_0001>
module attributes {stable_mosaic.version = 11 : i64} {
  func.func @mlp_kernel(%arg0: i32, %arg1: memref<128x32xf32, #tpu.memory_space<vmem>>, %arg2: memref<32x16xf32, #tpu.memory_space<vmem>>, %arg3: memref<1x16xf32, #tpu.memory_space<vmem>>, %arg4: memref<1x16xf32, #tpu.memory_space<vmem>>, %arg5: memref<1x1xf32, #tpu.memory_space<smem>>, %arg6: memref<128x1xf32, #tpu.memory_space<vmem>>) attributes {dimension_semantics = [#tpu.dimension_semantics<parallel>], iteration_bounds = array<i64: 2>, scalar_prefetch = 0 : i64, scratch_operands = 0 : i64, tpu.core_type = #tpu.core_type<tc>, window_params = [{transform_indices = @transform_0, window_bounds = array<i64: 128, 32>}, {pipeline_mode = #tpu.pipeline_mode<synchronous>, transform_indices = @transform_1, window_bounds = array<i64: 32, 16>}, {pipeline_mode = #tpu.pipeline_mode<synchronous>, transform_indices = @transform_2, window_bounds = array<i64: 1, 16>}, {pipeline_mode = #tpu.pipeline_mode<synchronous>, transform_indices = @transform_3, window_bounds = array<i64: 1, 16>}, {transform_indices = @transform_4, window_bounds = array<i64: 1, 1>}, {transform_indices = @transform_5, window_bounds = array<i64: 128, 1>}]} {
    %c0 = arith.constant 0 : index
    %c0_0 = arith.constant 0 : index
    %0 = vector.load %arg1[%c0, %c0_0] : memref<128x32xf32, #tpu.memory_space<vmem>>, vector<128x32xf32>
    %c0_1 = arith.constant 0 : index
    %c0_2 = arith.constant 0 : index
    %1 = vector.load %arg2[%c0_1, %c0_2] : memref<32x16xf32, #tpu.memory_space<vmem>>, vector<32x16xf32>
    %cst = arith.constant dense<0.000000e+00> : vector<128x16xf32>
    %2 = tpu.matmul %0, %1, %cst {dimension_numbers = #tpu.dot_dimension_numbers<[1], [0], [0], [1], [0, 0, 1, 1], [], []>} : vector<128x32xf32>, vector<32x16xf32>, vector<128x16xf32> -> vector<128x16xf32>
    %c0_3 = arith.constant 0 : index
    %c0_4 = arith.constant 0 : index
    %3 = vector.load %arg3[%c0_3, %c0_4] : memref<1x16xf32, #tpu.memory_space<vmem>>, vector<1x16xf32>
    %4 = vector.broadcast %3 : vector<1x16xf32> to vector<128x16xf32>
    %5 = arith.addf %2, %4 : vector<128x16xf32>
    %cst_5 = arith.constant 0.000000e+00 : f32
    %6 = vector.broadcast %cst_5 : f32 to vector<128x16xf32>
    %7 = arith.maximumf %5, %6 : vector<128x16xf32>
    %c0_6 = arith.constant 0 : index
    %c0_7 = arith.constant 0 : index
    %8 = vector.load %arg4[%c0_6, %c0_7] : memref<1x16xf32, #tpu.memory_space<vmem>>, vector<1x16xf32>
    %9 = vector.broadcast %8 : vector<1x16xf32> to vector<128x16xf32>
    %10 = arith.mulf %7, %9 : vector<128x16xf32>
    %cst_8 = arith.constant dense<0.000000e+00> : vector<128xf32>
    %11 = vector.multi_reduction <add>, %10, %cst_8 [1] : vector<128x16xf32> to vector<128xf32>
    %12 = vector.shape_cast %11 : vector<128xf32> to vector<128x1xf32>
    %c0_9 = arith.constant 0 : index
    %c0_10 = arith.constant 0 : index
    %13 = memref.load %arg5[%c0_9, %c0_10] : memref<1x1xf32, #tpu.memory_space<smem>>
    %14 = vector.broadcast %13 : f32 to vector<128x1xf32>
    %15 = arith.addf %12, %14 : vector<128x1xf32>
    %c0_11 = arith.constant 0 : index
    %c0_12 = arith.constant 0 : index
    %16 = vector.load %arg6[%c0_11, %c0_12] : memref<128x1xf32, #tpu.memory_space<vmem>>, vector<128x1xf32>
    tpu.vector_store %arg6[%c0_11, %c0_12], %15 {strides = array<i32>} : memref<128x1xf32, #tpu.memory_space<vmem>>, vector<128x1xf32>,
    return
  }
  func.func @transform_0(%arg0: i32) -> (i32, i32) {
    %c0_i32 = arith.constant 0 : i32
    %c0_i32_0 = arith.constant 0 : i32
    return %arg0, %c0_i32 : i32, i32
  }
  func.func @transform_1(%arg0: i32) -> (i32, i32) {
    %c0_i32 = arith.constant 0 : i32
    %c0_i32_0 = arith.constant 0 : i32
    %c0_i32_1 = arith.constant 0 : i32
    return %c0_i32, %c0_i32_0 : i32, i32
  }
  func.func @transform_2(%arg0: i32) -> (i32, i32) {
    %c0_i32 = arith.constant 0 : i32
    %c0_i32_0 = arith.constant 0 : i32
    %c0_i32_1 = arith.constant 0 : i32
    return %c0_i32, %c0_i32_0 : i32, i32
  }
  func.func @transform_3(%arg0: i32) -> (i32, i32) {
    %c0_i32 = arith.constant 0 : i32
    %c0_i32_0 = arith.constant 0 : i32
    %c0_i32_1 = arith.constant 0 : i32
    return %c0_i32, %c0_i32_0 : i32, i32
  }
  func.func @transform_4(%arg0: i32) -> (i32, i32) {
    %c0_i32 = arith.constant 0 : i32
    %c0_i32_0 = arith.constant 0 : i32
    %c0_i32_1 = arith.constant 0 : i32
    return %c0_i32, %c0_i32_0 : i32, i32
  }
  func.func @transform_5(%arg0: i32) -> (i32, i32) {
    %c0_i32 = arith.constant 0 : i32
    %c0_i32_0 = arith.constant 0 : i32
    return %arg0, %c0_i32 : i32, i32
  }
}

</mosaic_0001>

<llo_original>
// kernel: matrix_to_float_nn.1
$region0: #{matrix_to_float_nn.1}
  #allocation0 [shape = 'u32[]', space=smem, size = 0x4, offset = 0x4, fixed_abs, tag = 'smem constant byte address 0x4 - core index']
  #allocation1 [shape = 'u32[144,128]{1,0:T(1,128)}', space=vmem, size = 0x12000, scoped, tag = 'internal scratch']
  #allocation2 [shape = 'f32[1,1]{1,0:T(1,128)S(6)}', space=smem, size = 0x200, scoped, tag = 'scoped memory for matrix_to_float_nn.1']
  %s0 = inlined_call_operand.vmem [shape: f32[256,32], index: 0, kind: input, shape index: {}]
  %s1 = inlined_call_operand.vmem [shape: f32[32,16], index: 1, kind: input, shape index: {}]
  %s2 = inlined_call_operand.vmem [shape: f32[1,16], index: 2, kind: input, shape index: {}]
  %s3 = inlined_call_operand.vmem [shape: f32[1,16], index: 3, kind: input, shape index: {}]
  %s4 = inlined_call_operand.<no memory space> [shape: f32[1,1], index: 4, kind: input, shape index: {}]
  %s5 = inlined_call_operand.vmem [shape: f32[256,1], index: 5, kind: output, shape index: {}]
  %s6 = sld [smem:[#allocation0]]
  $region53: #{matrix_to_float_nn.1} parent=0
    _
  %s8 = ssub.s32 1, %s6
  %s9 = scalar_select 0, %s8, %s6
  %10 = sst [smem:[#allocation2]] %s4
  loop: start=0, step=1, limit=4
  $region2: #{matrix_to_float_nn.1} parent=0 // loop_pre_header
    _
  $region3: #{matrix_to_float_nn.1} parent=0 // loop_header
    %s12 = sphi 0, %s16
    %p13 = scmp.ge.s32.totalorder %s12, 4
    %s22 = sphi 0, %s24
    %s25 = sphi 0, %s22
    %s26 = sphi 0, %s25
    %s42 = sphi 0, %s26
    %s46 = sphi 0, %s46
    %s48 = sphi 0, %s46
    %s49 = sphi 0, %s48
    %s63 = sphi 0, %s49
    %s67 = sphi 0, %s67
    %s69 = sphi 0, %s67
    %s70 = sphi 0, %s69
    %s84 = sphi 0, %s70
    %s88 = sphi 0, %s88
    %s90 = sphi 0, %s88
    %s91 = sphi 0, %s90
    %s105 = sphi 0, %s91
    %s109 = sphi 0, %s109
    %s111 = sphi 0, %s109
    %s112 = sphi 0, %s111
    %s126 = sphi 0, %s112
    %s132 = sphi 0, %s134
    %s135 = sphi 0, %s132
    %s136 = sphi 0, %s135
    %s152 = sphi 0, %s136
  $region4: #{matrix_to_float_nn.1} parent=0 // loop_header_branch
    %15 = sbr.rel (%p13) target = $region8
  $region5: #{matrix_to_float_nn.1} parent=0 // loop_body
    %s17 = ssub.s32 %s12, 1
    %s18 = ssub.s32 %s12, 2
    %s19 = sadd.s32 %s12, 1
    %s20 = ssub.s32 %s12, %s19
    %p21 = scmp.eq.s32.totalorder %s20, 0
    %s23 = sadd.s32 %s22, 1
    %s24 = scalar_select %p21, %s22, %s23
    %p27 = pneg %p21
    %p28 = scmp.eq.s32.totalorder %s12, 1
    %p29 = por %p27, %p28
    %p30 = scmp.ne.s32.totalorder %s22, %s25
    %p31 = scmp.eq.s32.totalorder %s12, 0
    %p32 = por %p30, %p31
    %p33 = scmp.ne.s32.totalorder %s22, %s25
    %p34 = scmp.eq.s32.totalorder %s17, 1
    %p35 = por %p33, %p34
    %p36 = scmp.ne.s32.totalorder %s25, %s26
    %p37 = scmp.eq.s32.totalorder %s17, 0
    %p38 = por %p36, %p37
    %p39 = scmp.ne.s32.totalorder %s25, %s26
    %p40 = scmp.eq.s32.totalorder %s18, 1
    %p41 = por %p39, %p40
    %p43 = scmp.ne.s32.totalorder %s26, %s42
    %p44 = scmp.eq.s32.totalorder %s18, 0
    %p45 = por %p43, %p44
    %s47 = sadd.s32 %s46, 1
    %p50 = scmp.eq.s32.totalorder %s12, 1
    %p51 = scmp.ne.s32.totalorder %s46, %s48
    %p52 = scmp.eq.s32.totalorder %s12, 0
    %p53 = por %p51, %p52
    %p54 = scmp.ne.s32.totalorder %s46, %s48
    %p55 = scmp.eq.s32.totalorder %s17, 1
    %p56 = por %p54, %p55
    %p57 = scmp.ne.s32.totalorder %s48, %s49
    %p58 = scmp.eq.s32.totalorder %s17, 0
    %p59 = por %p57, %p58
    %p60 = scmp.ne.s32.totalorder %s48, %s49
    %p61 = scmp.eq.s32.totalorder %s18, 1
    %p62 = por %p60, %p61
    %p64 = scmp.ne.s32.totalorder %s49, %s63
    %p65 = scmp.eq.s32.totalorder %s18, 0
    %p66 = por %p64, %p65
    %s68 = sadd.s32 %s67, 1
    %p71 = scmp.eq.s32.totalorder %s12, 1
    %p72 = scmp.ne.s32.totalorder %s67, %s69
    %p73 = scmp.eq.s32.totalorder %s12, 0
    %p74 = por %p72, %p73
    %p75 = scmp.ne.s32.totalorder %s67, %s69
    %p76 = scmp.eq.s32.totalorder %s17, 1
    %p77 = por %p75, %p76
    %p78 = scmp.ne.s32.totalorder %s69, %s70
    %p79 = scmp.eq.s32.totalorder %s17, 0
    %p80 = por %p78, %p79
    %p81 = scmp.ne.s32.totalorder %s69, %s70
    %p82 = scmp.eq.s32.totalorder %s18, 1
    %p83 = por %p81, %p82
    %p85 = scmp.ne.s32.totalorder %s70, %s84
    %p86 = scmp.eq.s32.totalorder %s18, 0
    %p87 = por %p85, %p86
    %s89 = sadd.s32 %s88, 1
    %p92 = scmp.eq.s32.totalorder %s12, 1
    %p93 = scmp.ne.s32.totalorder %s88, %s90
    %p94 = scmp.eq.s32.totalorder %s12, 0
    %p95 = por %p93, %p94
    %p96 = scmp.ne.s32.totalorder %s88, %s90
    %p97 = scmp.eq.s32.totalorder %s17, 1
    %p98 = por %p96, %p97
    %p99 = scmp.ne.s32.totalorder %s90, %s91
    %p100 = scmp.eq.s32.totalorder %s17, 0
    %p101 = por %p99, %p100
    %p102 = scmp.ne.s32.totalorder %s90, %s91
    %p103 = scmp.eq.s32.totalorder %s18, 1
    %p104 = por %p102, %p103
    %p106 = scmp.ne.s32.totalorder %s91, %s105
    %p107 = scmp.eq.s32.totalorder %s18, 0
    %p108 = por %p106, %p107
    %s110 = sadd.s32 %s109, 1
    %p113 = scmp.eq.s32.totalorder %s12, 1
    %p114 = scmp.ne.s32.totalorder %s109, %s111
    %p115 = scmp.eq.s32.totalorder %s12, 0
    %p116 = por %p114, %p115
    %p117 = scmp.ne.s32.totalorder %s109, %s111
    %p118 = scmp.eq.s32.totalorder %s17, 1
    %p119 = por %p117, %p118
    %p120 = scmp.ne.s32.totalorder %s111, %s112
    %p121 = scmp.eq.s32.totalorder %s17, 0
    %p122 = por %p120, %p121
    %p123 = scmp.ne.s32.totalorder %s111, %s112
    %p124 = scmp.eq.s32.totalorder %s18, 1
    %p125 = por %p123, %p124
    %p127 = scmp.ne.s32.totalorder %s112, %s126
    %p128 = scmp.eq.s32.totalorder %s18, 0
    %p129 = por %p127, %p128
    %s130 = ssub.s32 %s12, %s19
    %p131 = scmp.eq.s32.totalorder %s130, 0
    %s133 = sadd.s32 %s132, 1
    %s134 = scalar_select %p131, %s132, %s133
    %p137 = pneg %p131
    %p138 = scmp.eq.s32.totalorder %s12, 1
    %p139 = por %p137, %p138
    %p140 = scmp.ne.s32.totalorder %s132, %s135
    %p141 = scmp.eq.s32.totalorder %s12, 0
    %p142 = por %p140, %p141
    %p143 = scmp.ne.s32.totalorder %s132, %s135
    %p144 = scmp.eq.s32.totalorder %s17, 1
    %p145 = por %p143, %p144
    %p146 = scmp.ne.s32.totalorder %s135, %s136
    %p147 = scmp.eq.s32.totalorder %s17, 0
    %p148 = por %p146, %p147
    %p149 = scmp.ne.s32.totalorder %s135, %s136
    %p150 = scmp.eq.s32.totalorder %s18, 1
    %p151 = por %p149, %p150
    %p153 = scmp.ne.s32.totalorder %s136, %s152
    %p154 = scmp.eq.s32.totalorder %s18, 0
    %p155 = por %p153, %p154
    %p156 = scmp.le.s32.totalorder 1, %s12
    %p157 = scmp.lt.s32.totalorder %s12, 3
    %p158 = pnand %p156, %p157
    %p159 = pneg %p158
    // Predicated region
    $region9: #{matrix_to_float_nn.1} parent=5 // pred_check
      _
    $region10: #{matrix_to_float_nn.1} parent=5 // pred_check_branch
      %161 = sbr.rel (%p158) target = $region12
    $region11: #{matrix_to_float_nn.1} parent=5 // pred_region
      %s162 = ssub.s32 %s12, 1
      // Predicated region
      $region13: #{matrix_to_float_nn.1} parent=11 // pred_check
        %p163 = pneg %p59
      $region14: #{matrix_to_float_nn.1} parent=11 // pred_check_branch
        %165 = sbr.rel (%p163) target = $region16
      $region15: #{matrix_to_float_nn.1} parent=11 // pred_region
        _
      $region16: #{matrix_to_float_nn.1} parent=11 // pred_fallthru
        _
      // Predicated region
      $region17: #{matrix_to_float_nn.1} parent=11 // pred_check
        %p166 = pneg %p80
      $region18: #{matrix_to_float_nn.1} parent=11 // pred_check_branch
        %168 = sbr.rel (%p166) target = $region20
      $region19: #{matrix_to_float_nn.1} parent=11 // pred_region
        _
      $region20: #{matrix_to_float_nn.1} parent=11 // pred_fallthru
        _
      // Predicated region
      $region21: #{matrix_to_float_nn.1} parent=11 // pred_check
        %p169 = pneg %p101
      $region22: #{matrix_to_float_nn.1} parent=11 // pred_check_branch
        %171 = sbr.rel (%p169) target = $region24
      $region23: #{matrix_to_float_nn.1} parent=11 // pred_region
        _
      $region24: #{matrix_to_float_nn.1} parent=11 // pred_fallthru
        _
      // Predicated region
      $region25: #{matrix_to_float_nn.1} parent=11 // pred_check
        %p172 = pneg %p122
      $region26: #{matrix_to_float_nn.1} parent=11 // pred_check_branch
        %174 = sbr.rel (%p172) target = $region28
      $region27: #{matrix_to_float_nn.1} parent=11 // pred_region
        _
      $region28: #{matrix_to_float_nn.1} parent=11 // pred_fallthru
        _
    $region12: #{matrix_to_float_nn.1} parent=5 // pred_fallthru
      _
    %p175 = scmp.lt.s32.totalorder %s12, 2
    // Predicated region
    $region29: #{matrix_to_float_nn.1} parent=5 // pred_check
      %p176 = pneg %p175
    $region30: #{matrix_to_float_nn.1} parent=5 // pred_check_branch
      %178 = sbr.rel (%p176) target = $region32
    $region31: #{matrix_to_float_nn.1} parent=5 // pred_region
      // Predicated region
      $region33: #{matrix_to_float_nn.1} parent=31 // pred_check
        %p179 = pneg %p32
      $region34: #{matrix_to_float_nn.1} parent=31 // pred_check_branch
        %181 = sbr.rel (%p179) target = $region36
      $region35: #{matrix_to_float_nn.1} parent=31 // pred_region
        %s182 = smul.u32 16, %s12
        %p183 = scmp.lt.s32.totalorder %s182, 31
        %s184 = scalar_select %p183, %s182, 31
        %s185 = smul.addr %s184, 8
        %s186 = scalar_lea.vmem %s0, %s185
        %s187 = smul.u32 16, %s12
      $region36: #{matrix_to_float_nn.1} parent=31 // pred_fallthru
        _
    $region32: #{matrix_to_float_nn.1} parent=5 // pred_fallthru
      _
    %p188 = scmp.le.s32.totalorder 1, %s12
    %p189 = scmp.lt.s32.totalorder %s12, 3
    %p190 = pnand %p188, %p189
    %p191 = pneg %p190
    // Predicated region
    $region37: #{matrix_to_float_nn.1} parent=5 // pred_check
      _
    $region38: #{matrix_to_float_nn.1} parent=5 // pred_check_branch
      %193 = sbr.rel (%p190) target = $region40
    $region39: #{matrix_to_float_nn.1} parent=5 // pred_region
      %s194 = ssub.s32 %s12, 1
      %s195 = smul.u32 16, %s17
      %p196 = scmp.lt.s32.totalorder %s195, 31
      %s197 = scalar_select %p196, %s195, 31
      %s198 = smul.addr %s197, 8
      %s199 = scalar_lea.vmem %s0, %s198
      %p200 = pneg %p38
      %p201 = pneg %p35
      %p202 = pneg %p59
      %p203 = pneg %p56
      %p204 = pneg %p80
      %p205 = pneg %p77
      %p206 = pneg %p101
      %p207 = pneg %p98
      %p208 = pneg %p122
      %p209 = pneg %p119
      %p210 = pneg %p148
      %p211 = pneg %p145
      %s212 = smul.u32 16, %s17
      %p213 = scmp.lt.s32.totalorder %s212, 31
      %s214 = scalar_select %p213, %s212, 31
      %s215 = smul.addr %s214, 8
      %s216 = scalar_lea.vmem %s5, %s215
      %s217 = smul.u32 16, %s17
      %p218 = scmp.lt.s32.totalorder %s217, 31
      %s219 = scalar_select %p218, %s217, 31
      %s220 = smul.addr %s219, 8
      %s221 = scalar_lea.vmem %s0, %s220
      %s222 = smul.u32 16, %s17
      %s223 = smul.u32 16, %s17
      %p224 = scmp.lt.s32.totalorder %s223, 31
      %s225 = scalar_select %p224, %s223, 31
      %s226 = smul.addr %s225, 8
      %s227 = scalar_lea.vmem %s5, %s226
      %s228 = smul.u32 16, %s17
      %v229 = vld [vmem:[%s221] sm:$0xff]
      %v230 = vld [vmem:[%s221 + $0x8] sm:$0xff]
      %v231 = vld [vmem:[%s221 + $0x10] sm:$0xff]
      %v232 = vld [vmem:[%s221 + $0x18] sm:$0xff]
      %v233 = vld [vmem:[%s221 + $0x20] sm:$0xff]
      %v234 = vld [vmem:[%s221 + $0x28] sm:$0xff]
      %v235 = vld [vmem:[%s221 + $0x30] sm:$0xff]
      %v236 = vld [vmem:[%s221 + $0x38] sm:$0xff]
      %v237 = vld [vmem:[%s221 + $0x40] sm:$0xff]
      %v238 = vld [vmem:[%s221 + $0x48] sm:$0xff]
      %v239 = vld [vmem:[%s221 + $0x50] sm:$0xff]
      %v240 = vld [vmem:[%s221 + $0x58] sm:$0xff]
      %v241 = vld [vmem:[%s221 + $0x60] sm:$0xff]
      %v242 = vld [vmem:[%s221 + $0x68] sm:$0xff]
      %v243 = vld [vmem:[%s221 + $0x70] sm:$0xff]
      %v244 = vld [vmem:[%s221 + $0x78] sm:$0xff]
      %v245 = vld [vmem:[%s1] sm:$0xff]
      %v246 = vld [vmem:[%s1 + $0x8] sm:$0xff]
      %v247 = vld [vmem:[%s1 + $0x10] sm:$0xff]
      %v248 = vld [vmem:[%s1 + $0x18] sm:$0xff]
      %v249 = vld [vmem:[%s2] sm:$0x1]
      %v251 = vlaneseq
      %v252 = vshrl.u32 %v251, 7
      %v253 = vsub.s32 0, %v252
      %v254 = vrot.slane %v249, %v253
      %vm256 = vcmask 261120
      %v258 = vsel %vm256, %v229, 0
      %v261 = vsel %vm256, %v230, 0
      %v264 = vsel %vm256, %v231, 0
      %v267 = vsel %vm256, %v232, 0
      %v270 = vsel %vm256, %v233, 0
      %v273 = vsel %vm256, %v234, 0
      %v276 = vsel %vm256, %v235, 0
      %v279 = vsel %vm256, %v236, 0
      %v282 = vsel %vm256, %v237, 0
      %v285 = vsel %vm256, %v238, 0
      %v288 = vsel %vm256, %v239, 0
      %v291 = vsel %vm256, %v240, 0
      %v294 = vsel %vm256, %v241, 0
      %v297 = vsel %vm256, %v242, 0
      %v300 = vsel %vm256, %v243, 0
      %v303 = vsel %vm256, %v244, 0
      %305 = vmatprep.subr.mxu0 0.0
      %306 = vmatpush1.msra.mxu0 0.0
      %307 = vmatprep.subr.mxu0 0.0
      %308 = vmatpush1.msra.mxu0 0.0
      %309 = vmatprep.subr.mxu0 0.0
      %310 = vmatpush1.msra.mxu0 0.0
      %311 = vmatprep.subr.mxu0 0.0
      %312 = vmatpush1.msra.mxu0 0.0
      %313 = vmatprep.subr.mxu0 0.0
      %314 = vmatpush1.msra.mxu0 0.0
      %315 = vmatprep.subr.mxu0 0.0
      %316 = vmatpush1.msra.mxu0 0.0
      %317 = vmatprep.subr.mxu0 0.0
      %318 = vmatpush1.msra.mxu0 0.0
      %319 = vmatprep.subr.mxu0 0.0
      %320 = vmatpush1.msra.mxu0 0.0
      %321 = vmatprep.subr.mxu0 0.0
      %322 = vmatpush1.msra.mxu0 0.0
      %323 = vmatprep.subr.mxu0 0.0
      %324 = vmatpush1.msra.mxu0 0.0
      %325 = vmatprep.subr.mxu0 0.0
      %326 = vmatpush1.msra.mxu0 0.0
      %327 = vmatprep.subr.mxu0 0.0
      %328 = vmatpush1.msra.mxu0 0.0
      %329 = vmatprep.subr.mxu0 0.0
      %330 = vmatpush1.msra.mxu0 %v248
      %331 = vmatprep.subr.mxu0 0.0
      %332 = vmatpush1.msra.mxu0 %v247
      %333 = vmatprep.subr.mxu0 0.0
      %334 = vmatpush1.msra.mxu0 %v246
      %335 = vmatprep.subr.mxu0 0.0
      %336 = vmatpush1.msra.mxu0 %v245
      %337 = vmatprep.subr.mxu0 0.0
      %338 = vmatpush2.msra.mxu0 0.0
      %339 = vmatprep.subr.mxu0 0.0
      %340 = vmatpush2.msra.mxu0 0.0
      %341 = vmatprep.subr.mxu0 0.0
      %342 = vmatpush2.msra.mxu0 0.0
      %343 = vmatprep.subr.mxu0 0.0
      %344 = vmatpush2.msra.mxu0 0.0
      %345 = vmatprep.subr.mxu0 0.0
      %346 = vmatpush2.msra.mxu0 0.0
      %347 = vmatprep.subr.mxu0 0.0
      %348 = vmatpush2.msra.mxu0 0.0
      %349 = vmatprep.subr.mxu0 0.0
      %350 = vmatpush2.msra.mxu0 0.0
      %351 = vmatprep.subr.mxu0 0.0
      %352 = vmatpush2.msra.mxu0 0.0
      %353 = vmatprep.subr.mxu0 0.0
      %354 = vmatpush2.msra.mxu0 0.0
      %355 = vmatprep.subr.mxu0 0.0
      %356 = vmatpush2.msra.mxu0 0.0
      %357 = vmatprep.subr.mxu0 0.0
      %358 = vmatpush2.msra.mxu0 0.0
      %359 = vmatprep.subr.mxu0 0.0
      %360 = vmatpush2.msra.mxu0 0.0
      %361 = vmatprep.subr.mxu0 0.0
      %362 = vmatpush2.msra.mxu0 0.0
      %363 = vmatprep.subr.mxu0 0.0
      %364 = vmatpush2.msra.mxu0 0.0
      %365 = vmatprep.subr.mxu0 0.0
      %366 = vmatpush2.msra.mxu0 0.0
      %367 = vmatprep.subr.mxu0 0.0
      %368 = vmatpush2.msra.mxu0 0.0
      %369 = vmatprep.mubr.f32.mxu0 0.0
      %370 = vmatmul.mubr.f32.gmra.mxu0 %v258
      %v371 = vpop.f32.mrf.mxu0
      %v372 = vadd.f32 %v254, %v371
      %v373 = vpop.f32.mrf.mxu0
      %374 = vmatprep.mubr.f32.mxu0 0.0
      %375 = vmatmul.mubr.f32.gmra.mxu0 %v261
      %v376 = vpop.f32.mrf.mxu0
      %v377 = vadd.f32 %v254, %v376
      %v378 = vpop.f32.mrf.mxu0
      %379 = vmatprep.mubr.f32.mxu0 0.0
      %380 = vmatmul.mubr.f32.gmra.mxu0 %v264
      %v381 = vpop.f32.mrf.mxu0
      %v382 = vadd.f32 %v254, %v381
      %v383 = vpop.f32.mrf.mxu0
      %384 = vmatprep.mubr.f32.mxu0 0.0
      %385 = vmatmul.mubr.f32.gmra.mxu0 %v267
      %v386 = vpop.f32.mrf.mxu0
      %v387 = vadd.f32 %v254, %v386
      %v388 = vpop.f32.mrf.mxu0
      %389 = vmatprep.mubr.f32.mxu0 0.0
      %390 = vmatmul.mubr.f32.gmra.mxu0 %v270
      %v391 = vpop.f32.mrf.mxu0
      %v392 = vadd.f32 %v254, %v391
      %v393 = vpop.f32.mrf.mxu0
      %394 = vmatprep.mubr.f32.mxu0 0.0
      %395 = vmatmul.mubr.f32.gmra.mxu0 %v273
      %v396 = vpop.f32.mrf.mxu0
      %v397 = vadd.f32 %v254, %v396
      %v398 = vpop.f32.mrf.mxu0
      %399 = vmatprep.mubr.f32.mxu0 0.0
      %400 = vmatmul.mubr.f32.gmra.mxu0 %v276
      %v401 = vpop.f32.mrf.mxu0
      %v402 = vadd.f32 %v254, %v401
      %v403 = vpop.f32.mrf.mxu0
      %404 = vmatprep.mubr.f32.mxu0 0.0
      %405 = vmatmul.mubr.f32.gmra.mxu0 %v279
      %v406 = vpop.f32.mrf.mxu0
      %v407 = vadd.f32 %v254, %v406
      %v408 = vpop.f32.mrf.mxu0
      %409 = vmatprep.mubr.f32.mxu0 0.0
      %410 = vmatmul.mubr.f32.gmra.mxu0 %v282
      %v411 = vpop.f32.mrf.mxu0
      %v412 = vadd.f32 %v254, %v411
      %v413 = vpop.f32.mrf.mxu0
      %414 = vmatprep.mubr.f32.mxu0 0.0
      %415 = vmatmul.mubr.f32.gmra.mxu0 %v285
      %v416 = vpop.f32.mrf.mxu0
      %v417 = vadd.f32 %v254, %v416
      %v418 = vpop.f32.mrf.mxu0
      %419 = vmatprep.mubr.f32.mxu0 0.0
      %420 = vmatmul.mubr.f32.gmra.mxu0 %v288
      %v421 = vpop.f32.mrf.mxu0
      %v422 = vadd.f32 %v254, %v421
      %v423 = vpop.f32.mrf.mxu0
      %424 = vmatprep.mubr.f32.mxu0 0.0
      %425 = vmatmul.mubr.f32.gmra.mxu0 %v291
      %v426 = vpop.f32.mrf.mxu0
      %v427 = vadd.f32 %v254, %v426
      %v428 = vpop.f32.mrf.mxu0
      %429 = vmatprep.mubr.f32.mxu0 0.0
      %430 = vmatmul.mubr.f32.gmra.mxu0 %v294
      %v431 = vpop.f32.mrf.mxu0
      %v432 = vadd.f32 %v254, %v431
      %v433 = vpop.f32.mrf.mxu0
      %434 = vmatprep.mubr.f32.mxu0 0.0
      %435 = vmatmul.mubr.f32.gmra.mxu0 %v297
      %v436 = vpop.f32.mrf.mxu0
      %v437 = vadd.f32 %v254, %v436
      %v438 = vpop.f32.mrf.mxu0
      %439 = vmatprep.mubr.f32.mxu0 0.0
      %440 = vmatmul.mubr.f32.gmra.mxu0 %v300
      %v441 = vpop.f32.mrf.mxu0
      %v442 = vadd.f32 %v254, %v441
      %v443 = vpop.f32.mrf.mxu0
      %444 = vmatprep.mubr.f32.mxu0 0.0
      %445 = vmatmul.mubr.f32.gmra.mxu0 %v303
      %v446 = vpop.f32.mrf.mxu0
      %v447 = vadd.f32 %v254, %v446
      %v448 = vpop.f32.mrf.mxu0
      %449 = vdwg.mxu0
      %v450 = vmax.f32 %v372, 0.0
      %v451 = vmax.f32 %v377, 0.0
      %v452 = vmax.f32 %v382, 0.0
      %v453 = vmax.f32 %v387, 0.0
      %v454 = vmax.f32 %v392, 0.0
      %v455 = vmax.f32 %v397, 0.0
      %v456 = vmax.f32 %v402, 0.0
      %v457 = vmax.f32 %v407, 0.0
      %v458 = vmax.f32 %v412, 0.0
      %v459 = vmax.f32 %v417, 0.0
      %v460 = vmax.f32 %v422, 0.0
      %v461 = vmax.f32 %v427, 0.0
      %v462 = vmax.f32 %v432, 0.0
      %v463 = vmax.f32 %v437, 0.0
      %v464 = vmax.f32 %v442, 0.0
      %v465 = vmax.f32 %v447, 0.0
      %v466 = vld [vmem:[%s3] sm:$0x1]
      %v468 = vlaneseq
      %v469 = vshrl.u32 %v468, 7
      %v470 = vsub.s32 0, %v469
      %v471 = vrot.slane %v466, %v470
      %v473 = vmul.f32 %v450, %v471
      %v474 = vmul.f32 %v451, %v471
      %v475 = vmul.f32 %v452, %v471
      %v476 = vmul.f32 %v453, %v471
      %v477 = vmul.f32 %v454, %v471
      %v478 = vmul.f32 %v455, %v471
      %v479 = vmul.f32 %v456, %v471
      %v480 = vmul.f32 %v457, %v471
      %v481 = vmul.f32 %v458, %v471
      %v482 = vmul.f32 %v459, %v471
      %v483 = vmul.f32 %v460, %v471
      %v484 = vmul.f32 %v461, %v471
      %v485 = vmul.f32 %v462, %v471
      %v486 = vmul.f32 %v463, %v471
      %v487 = vmul.f32 %v464, %v471
      %v488 = vmul.f32 %v465, %v471
      %vm489 = vcmask 130048
      %v490 = vsel %vm489, %v473, 0.0
      %491 = vadd.xlane.f32.xlu0 %v490
      %v492 = vpop.xlane.xlu0 %491
      %v493 = vsel %vm489, %v474, 0.0
      %494 = vadd.xlane.f32.xlu0 %v493
      %v495 = vpop.xlane.xlu0 %494
      %v496 = vsel %vm489, %v475, 0.0
      %497 = vadd.xlane.f32.xlu0 %v496
      %v498 = vpop.xlane.xlu0 %497
      %v499 = vsel %vm489, %v476, 0.0
      %500 = vadd.xlane.f32.xlu0 %v499
      %v501 = vpop.xlane.xlu0 %500
      %v502 = vsel %vm489, %v477, 0.0
      %503 = vadd.xlane.f32.xlu0 %v502
      %v504 = vpop.xlane.xlu0 %503
      %v505 = vsel %vm489, %v478, 0.0
      %506 = vadd.xlane.f32.xlu0 %v505
      %v507 = vpop.xlane.xlu0 %506
      %v508 = vsel %vm489, %v479, 0.0
      %509 = vadd.xlane.f32.xlu0 %v508
      %v510 = vpop.xlane.xlu0 %509
      %v511 = vsel %vm489, %v480, 0.0
      %512 = vadd.xlane.f32.xlu0 %v511
      %v513 = vpop.xlane.xlu0 %512
      %v514 = vsel %vm489, %v481, 0.0
      %515 = vadd.xlane.f32.xlu0 %v514
      %v516 = vpop.xlane.xlu0 %515
      %v517 = vsel %vm489, %v482, 0.0
      %518 = vadd.xlane.f32.xlu0 %v517
      %v519 = vpop.xlane.xlu0 %518
      %v520 = vsel %vm489, %v483, 0.0
      %521 = vadd.xlane.f32.xlu0 %v520
      %v522 = vpop.xlane.xlu0 %521
      %v523 = vsel %vm489, %v484, 0.0
      %524 = vadd.xlane.f32.xlu0 %v523
      %v525 = vpop.xlane.xlu0 %524
      %v526 = vsel %vm489, %v485, 0.0
      %527 = vadd.xlane.f32.xlu0 %v526
      %v528 = vpop.xlane.xlu0 %527
      %v529 = vsel %vm489, %v486, 0.0
      %530 = vadd.xlane.f32.xlu0 %v529
      %v531 = vpop.xlane.xlu0 %530
      %v532 = vsel %vm489, %v487, 0.0
      %533 = vadd.xlane.f32.xlu0 %v532
      %v534 = vpop.xlane.xlu0 %533
      %v535 = vsel %vm489, %v488, 0.0
      %536 = vadd.xlane.f32.xlu0 %v535
      %v537 = vpop.xlane.xlu0 %536
      %s538 = sld [smem:[#allocation2]]
      %v539 = vstv %s538
      %v540 = vadd.f32 %v492, %v539
      %v541 = vadd.f32 %v495, %v539
      %v542 = vadd.f32 %v498, %v539
      %v543 = vadd.f32 %v501, %v539
      %v544 = vadd.f32 %v504, %v539
      %v545 = vadd.f32 %v507, %v539
      %v546 = vadd.f32 %v510, %v539
      %v547 = vadd.f32 %v513, %v539
      %v548 = vadd.f32 %v516, %v539
      %v549 = vadd.f32 %v519, %v539
      %v550 = vadd.f32 %v522, %v539
      %v551 = vadd.f32 %v525, %v539
      %v552 = vadd.f32 %v528, %v539
      %v553 = vadd.f32 %v531, %v539
      %v554 = vadd.f32 %v534, %v539
      %v555 = vadd.f32 %v537, %v539
      %vm556 = vcmask 7168
      %557 = vst.msk [vmem:[%s227] sm:$0xff] %vm556, %v540
      %558 = vst.msk [vmem:[%s227 + $0x8] sm:$0xff] %vm556, %v541
      %559 = vst.msk [vmem:[%s227 + $0x10] sm:$0xff] %vm556, %v542
      %560 = vst.msk [vmem:[%s227 + $0x18] sm:$0xff] %vm556, %v543
      %561 = vst.msk [vmem:[%s227 + $0x20] sm:$0xff] %vm556, %v544
      %562 = vst.msk [vmem:[%s227 + $0x28] sm:$0xff] %vm556, %v545
      %563 = vst.msk [vmem:[%s227 + $0x30] sm:$0xff] %vm556, %v546
      %564 = vst.msk [vmem:[%s227 + $0x38] sm:$0xff] %vm556, %v547
      %565 = vst.msk [vmem:[%s227 + $0x40] sm:$0xff] %vm556, %v548
      %566 = vst.msk [vmem:[%s227 + $0x48] sm:$0xff] %vm556, %v549
      %567 = vst.msk [vmem:[%s227 + $0x50] sm:$0xff] %vm556, %v550
      %568 = vst.msk [vmem:[%s227 + $0x58] sm:$0xff] %vm556, %v551
      %569 = vst.msk [vmem:[%s227 + $0x60] sm:$0xff] %vm556, %v552
      %570 = vst.msk [vmem:[%s227 + $0x68] sm:$0xff] %vm556, %v553
      %571 = vst.msk [vmem:[%s227 + $0x70] sm:$0xff] %vm556, %v554
      %572 = vst.msk [vmem:[%s227 + $0x78] sm:$0xff] %vm556, %v555
      %s573 = smul.u32 16, %s17
      %p574 = scmp.lt.s32.totalorder %s573, 31
      %s575 = scalar_select %p574, %s573, 31
      %s576 = smul.addr %s575, 8
      %s577 = scalar_lea.vmem %s5, %s576
      // Predicated region
      $region41: #{matrix_to_float_nn.1} parent=39 // pred_check
        %p578 = pneg %p145
      $region42: #{matrix_to_float_nn.1} parent=39 // pred_check_branch
        %580 = sbr.rel (%p578) target = $region44
      $region43: #{matrix_to_float_nn.1} parent=39 // pred_region
        %s581 = smul.u32 16, %s17
      $region44: #{matrix_to_float_nn.1} parent=39 // pred_fallthru
        _
    $region40: #{matrix_to_float_nn.1} parent=5 // pred_fallthru
      _
    %p582 = scmp.le.s32.totalorder 2, %s12
    // Predicated region
    $region45: #{matrix_to_float_nn.1} parent=5 // pred_check
      %p583 = pneg %p582
    $region46: #{matrix_to_float_nn.1} parent=5 // pred_check_branch
      %585 = sbr.rel (%p583) target = $region48
    $region47: #{matrix_to_float_nn.1} parent=5 // pred_region
      %s586 = ssub.s32 %s12, 2
      // Predicated region
      $region49: #{matrix_to_float_nn.1} parent=47 // pred_check
        %p587 = pneg %p151
      $region50: #{matrix_to_float_nn.1} parent=47 // pred_check_branch
        %589 = sbr.rel (%p587) target = $region52
      $region51: #{matrix_to_float_nn.1} parent=47 // pred_region
        %s590 = smul.u32 16, %s18
        %p591 = scmp.lt.s32.totalorder %s590, 31
        %s592 = scalar_select %p591, %s590, 31
        %s593 = smul.addr %s592, 8
        %s594 = scalar_lea.vmem %s5, %s593
      $region52: #{matrix_to_float_nn.1} parent=47 // pred_fallthru
        _
    $region48: #{matrix_to_float_nn.1} parent=5 // pred_fallthru
      _
  $region6: #{matrix_to_float_nn.1} parent=0 // loop_footer
    %s16 = sadd.s32 1, %s12
  $region7: #{matrix_to_float_nn.1} parent=0 // loop_footer_branch
    %11 = sbr.rel target = $region3
  $region8: #{matrix_to_float_nn.1} parent=0 // loop_exit
    _

</llo_original>
